<compile_context>
chip_gen: v7x
topology: tpu7x:2x2x1
jax: 0.10.0
libtpu: 0.0.40
codegen_flags: <defaults>
</compile_context>

<pallas_src>
import functools

import numpy as np
import jax
import jax.numpy as jnp
from jax.experimental import pallas as pl
from jax.experimental.pallas import tpu as pltpu


def _round_up(x: int, m: int) -> int:
    return ((x + m - 1) // m) * m


def _vmem_budget_bytes():
    """Returns (per-block in+out budget incl. double buffering, scoped VMEM limit)."""
    kind = ""
    try:
        kind = jax.devices()[0].device_kind.lower()
    except Exception:
        pass
    if "v7" in kind or "7x" in kind:
        # v7x: 64 MiB VMEM per TensorCore -> tighter block budget / limit.
        return 12 * 1024 * 1024, 48 * 1024 * 1024
    # v5e / v6e: 128 MiB physical VMEM.
    return 24 * 1024 * 1024, 96 * 1024 * 1024


def _pad_kernel(x_ref, o_ref, *, pad_value):
    # x_ref : (TB, S)   real tokens for this batch tile (length-tile 0 covers all of S)
    # o_ref : (TB, TL)  output tile -- written with a single lane-dense full-tile store
    S = x_ref.shape[1]
    TB, TL = o_ref.shape
    j = pl.program_id(1)  # length-tile index

    @pl.when(j == 0)
    def _():
        x = x_ref[...]
        if TL > S:
            tail = jnp.full((TB, TL - S), pad_value, dtype=o_ref.dtype)
            o_ref[...] = jnp.concatenate([x, tail], axis=1)
        else:
            o_ref[...] = x

    @pl.when(j > 0)
    def _():
        o_ref[...] = jnp.full((TB, TL), pad_value, dtype=o_ref.dtype)


def pad_transform(x: jax.Array, max_length: int, pad_value, *, min_pallas_bytes: int = 1 << 20) -> jax.Array:
    """Pad the last axis of `x` up to `max_length` with `pad_value`."""
    S = x.shape[-1]
    if S >= max_length:
        # torch PadTransform returns the input untouched in this case.
        return x

    lead = x.shape[:-1]
    B = int(np.prod(lead)) if lead else 1
    x2 = x.reshape(B, S)
    dtype = x2.dtype
    itemsize = np.dtype(dtype).itemsize
    # F.pad casts the (float) pad value to the tensor dtype; mirror that.
    fill = np.dtype(dtype).type(pad_value)
    L = max_length

    # Tiny problems are pure launch-overhead territory: let XLA's pad do it.
    if B * L * itemsize < min_pallas_bytes:
        return jnp.pad(x, [(0, 0)] * (x.ndim - 1) + [(0, L - S)], constant_values=fill)

    # ---- layout-rounded VMEM budgeting -------------------------------------
    sub = max(8, 32 // itemsize)          # sublane multiple for this dtype
    Sr = _round_up(S, 128)                # lane-padded resident widths
    Lr = _round_up(L, 128)
    block_budget, vmem_limit = _vmem_budget_bytes()

    # First choice: keep the whole padded length in one block (TL == L).
    row_bytes = (Sr + Lr) * itemsize * 2  # in + out, double-buffered
    rows = (block_budget // row_bytes) // sub * sub
    if rows >= sub:
        TL, nl = L, 1
    else:
        # Very long max_length: tile the length axis in 128-lane multiples.
        # Length-tile 0 must still cover all S real tokens.
        avail = block_budget // (sub * itemsize * 2) - Sr
        TL = (avail // 128) * 128
        if TL < 128 or TL < Sr:
            # Even a minimal block does not fit (degenerately huge S).
            # TODO(synk): could also stream S in chunks; fall back to XLA pad here.
            return jnp.pad(x, [(0, 0)] * (x.ndim - 1) + [(0, L - S)], constant_values=fill)
        if TL >= L:
            TL, nl = L, 1
        else:
            nl = pl.cdiv(L, TL)
        rows = sub

    # Batch tile: prefer >=2 total grid steps (v7x megacore + pipeline overlap),
    # keep blocks sublane-aligned; a block equal to the full batch dim is always legal.
    if B <= rows:
        TB = B
        if nl == 1 and B >= 2 * sub:
            TB = _round_up(-(-B // 2), sub)   # split into >=2 batch blocks
    else:
        TB = rows
    nb = pl.cdiv(B, TB)
    grid = (nb, nl)

    out = pl.pallas_call(
        functools.partial(_pad_kernel, pad_value=fill),
        out_shape=jax.ShapeDtypeStruct((B, L), dtype),
        grid_spec=pltpu.PrefetchScalarGridSpec(
            num_scalar_prefetch=0,
            grid=grid,
            in_specs=[pl.BlockSpec((TB, S), lambda i, j: (i, 0))],
            out_specs=pl.BlockSpec((TB, TL), lambda i, j: (i, j)),
        ),
        compiler_params=pltpu.CompilerParams(
            dimension_semantics=("parallel", "parallel"),
            vmem_limit_bytes=vmem_limit,
        ),
        cost_estimate=pl.CostEstimate(
            flops=0,
            transcendentals=0,
            bytes_accessed=B * (S + L) * itemsize,
        ),
    )(x2)

    return out.reshape(*lead, L)


if __name__ == "__main__":
    key = jax.random.PRNGKey(0)
    B, S = 4, 16
    max_length = 64
    pad_value = 1

    # Batch of integer token-id sequences (pad path, forced through the kernel).
    tokens = jax.random.randint(key, (B, S), 0, 30000, dtype=jnp.int32)
    padded = pad_transform(tokens, max_length, pad_value, min_pallas_bytes=0)
    jax.block_until_ready(padded)
    ref = jnp.pad(tokens, ((0, 0), (0, max_length - S)), constant_values=pad_value)
    assert padded.shape == (B, max_length)
    assert padded.dtype == tokens.dtype
    assert bool(jnp.all(padded == ref))

    # Single 1-D sequence path (forced through the kernel).
    single = jax.random.randint(jax.random.PRNGKey(1), (S,), 0, 30000, dtype=jnp.int32)
    padded_single = pad_transform(single, max_length, pad_value, min_pallas_bytes=0)
    jax.block_until_ready(padded_single)
    ref_single = jnp.pad(single, (0, max_length - S), constant_values=pad_value)
    assert padded_single.shape == (max_length,)
    assert bool(jnp.all(padded_single == ref_single))

    # Larger batch exercising the default (multi-step grid) Pallas path.
    bulk = jax.random.randint(jax.random.PRNGKey(2), (1024, 40), 0, 30000, dtype=jnp.int32)
    padded_bulk = pad_transform(bulk, 256, pad_value)
    jax.block_until_ready(padded_bulk)
    ref_bulk = jnp.pad(bulk, ((0, 0), (0, 256 - 40)), constant_values=pad_value)
    assert padded_bulk.shape == (1024, 256)
    assert bool(jnp.all(padded_bulk == ref_bulk))

    # No-pad path: sequence already >= max_length is returned unchanged.
    long = jax.random.randint(jax.random.PRNGKey(3), (B, max_length + 8), 0, 30000, dtype=jnp.int32)
    out_long = pad_transform(long, max_length, pad_value)
    jax.block_until_ready(out_long)
    assert out_long.shape == long.shape
    assert bool(jnp.all(out_long == long))

    print("KERNEL_OK")
</pallas_src>

<mosaic_0001>
module attributes {stable_mosaic.version = 11 : i64} {
  func.func @_pad_kernel(%arg0: i32, %arg1: i32, %arg2: memref<4x16xi32, #tpu.memory_space<vmem>>, %arg3: memref<4x64xi32, #tpu.memory_space<vmem>>) attributes {dimension_semantics = [#tpu.dimension_semantics<parallel>, #tpu.dimension_semantics<parallel>], iteration_bounds = array<i64: 1, 1>, scalar_prefetch = 0 : i64, scratch_operands = 0 : i64, tpu.core_type = #tpu.core_type<tc>, window_params = [{transform_indices = @transform_0, window_bounds = array<i64: 4, 16>}, {transform_indices = @transform_1, window_bounds = array<i64: 4, 64>}]} {
    %c0_i32 = arith.constant 0 : i32
    %0 = arith.cmpi eq, %arg1, %c0_i32 : i32
    %1 = arith.extui %0 : i1 to i32
    %c0_i32_0 = arith.constant 0 : i32
    %2 = arith.cmpi ne, %1, %c0_i32_0 : i32
    scf.if %2 {
      %c0 = arith.constant 0 : index
      %c0_3 = arith.constant 0 : index
      %6 = vector.load %arg2[%c0, %c0_3] : memref<4x16xi32, #tpu.memory_space<vmem>>, vector<4x16xi32>
      %c1_i32 = arith.constant 1 : i32
      %7 = vector.broadcast %c1_i32 : i32 to vector<4x48xi32>
      %8 = tpu.concatenate %6, %7 in 1 : vector<4x16xi32>, vector<4x48xi32> -> vector<4x64xi32>
      %c0_4 = arith.constant 0 : index
      %c0_5 = arith.constant 0 : index
      %9 = vector.load %arg3[%c0_4, %c0_5] : memref<4x64xi32, #tpu.memory_space<vmem>>, vector<4x64xi32>
      tpu.vector_store %arg3[%c0_4, %c0_5], %8 {strides = array<i32>} : memref<4x64xi32, #tpu.memory_space<vmem>>, vector<4x64xi32>,
    } else {
    }
    %c0_i32_1 = arith.constant 0 : i32
    %3 = arith.cmpi sgt, %arg1, %c0_i32_1 : i32
    %4 = arith.extui %3 : i1 to i32
    %c0_i32_2 = arith.constant 0 : i32
    %5 = arith.cmpi ne, %4, %c0_i32_2 : i32
    scf.if %5 {
      %c1_i32 = arith.constant 1 : i32
      %6 = vector.broadcast %c1_i32 : i32 to vector<4x64xi32>
      %c0 = arith.constant 0 : index
      %c0_3 = arith.constant 0 : index
      %7 = vector.load %arg3[%c0, %c0_3] : memref<4x64xi32, #tpu.memory_space<vmem>>, vector<4x64xi32>
      tpu.vector_store %arg3[%c0, %c0_3], %6 {strides = array<i32>} : memref<4x64xi32, #tpu.memory_space<vmem>>, vector<4x64xi32>,
    } else {
    }
    return
  }
  func.func @transform_0(%arg0: i32, %arg1: i32) -> (i32, i32) {
    %c0_i32 = arith.constant 0 : i32
    %c0_i32_0 = arith.constant 0 : i32
    return %arg0, %c0_i32 : i32, i32
  }
  func.func @transform_1(%arg0: i32, %arg1: i32) -> (i32, i32) {
    %c0_i32 = arith.constant 0 : i32
    return %arg0, %arg1 : i32, i32
  }
}

</mosaic_0001>

<llo_original>
// kernel: tpu_custom_call.1
$region0: #{tpu_custom_call.1}
  #allocation0 [shape = 'u32[]', space=smem, size = 0x4, offset = 0x4, fixed_abs, tag = 'smem constant byte address 0x4 - core index']
  #allocation1 [shape = 'u32[144,128]{1,0:T(1,128)}', space=vmem, size = 0x12000, scoped, tag = 'internal scratch']
  %s0 = inlined_call_operand.hbm [shape: s32[4,16], index: 0, kind: input, shape index: {}]
  %s1 = inlined_call_operand.hbm [shape: s32[4,64], index: 1, kind: output, shape index: {}]
  %s2 = sld [smem:[#allocation0]]
  $region26: #{tpu_custom_call.1} parent=0
    _
  %s4 = ssub.s32 1, %s2
  %s5 = scalar_select 0, %s4, %s2
  $region1: #{tpu_custom_call.1} parent=0
    #allocation2 [shape = 'u8[2048]{0}', space=vmem, size = 0x800, scoped, tag = 'input window, operand 0, single buffered']
    #allocation3 [shape = 's32[1]{0}', space=sflag, size = 0x4, scoped, tag = 'scoped memory for tpu_custom_call.1']
    #allocation4 [shape = 's32[1]{0}', space=sflag, size = 0x4, scoped, tag = 'scoped memory for tpu_custom_call.1']
    #allocation5 [shape = 'u8[2048]{0}', space=vmem, size = 0x800, scoped, tag = 'output window, operand 0, single buffered']
    %6 = vsyncpa [#allocation3], 0
    %7 = vsyncpa [#allocation4], 0
    // Predicated region
    $region2: #{tpu_custom_call.1} parent=1 // pred_check
      _
    $region3: #{tpu_custom_call.1} parent=1 // pred_check_branch
      %9 = sbr.rel (0) target = $region5
    $region4: #{tpu_custom_call.1} parent=1 // pred_region
      %s11 = ssub.s32 64, 64
      %12 = vsyncadd [#allocation3], %s11
      %s14 = sshll.u32 [#allocation2], 4
      %s15 = int_to_ptr.vmem [resolvable:$true] %s14
      %17 = dma.hbm_to_vmem [thread:$0]  %s0, 64, %s15, [#allocation3]
    $region5: #{tpu_custom_call.1} parent=1 // pred_fallthru
      _
    // Predicated region
    $region6: #{tpu_custom_call.1} parent=1 // pred_check
      _
    $region7: #{tpu_custom_call.1} parent=1 // pred_check_branch
      %19 = sbr.rel (0) target = $region9
    $region8: #{tpu_custom_call.1} parent=1 // pred_region
      %20 = dma.done [#allocation3], 64
    $region9: #{tpu_custom_call.1} parent=1 // pred_fallthru
      _
    %p21 = scmp.eq.s32.totalorder 0, 0
    // Predicated region
    $region10: #{tpu_custom_call.1} parent=1 // pred_check
      %p22 = pneg %p21
    $region11: #{tpu_custom_call.1} parent=1 // pred_check_branch
      %24 = sbr.rel (%p22) target = $region13
    $region12: #{tpu_custom_call.1} parent=1 // pred_region
      %v25 = vld [vmem:[#allocation2] sm:$0xf]
      %vm26 = vcmask 130048
      %v27 = vsel %vm26, %v25, 1
      %vm28 = vcmask 519168
      %29 = vst.msk [vmem:[#allocation5] sm:$0xf] %vm28, %v27
    $region13: #{tpu_custom_call.1} parent=1 // pred_fallthru
      _
    %p30 = scmp.gt.s32.totalorder 0, 0
    // Predicated region
    $region14: #{tpu_custom_call.1} parent=1 // pred_check
      %p31 = pneg %p30
    $region15: #{tpu_custom_call.1} parent=1 // pred_check_branch
      %33 = sbr.rel (%p31) target = $region17
    $region16: #{tpu_custom_call.1} parent=1 // pred_region
      %vm34 = vcmask 519168
      %35 = vst.msk [vmem:[#allocation5] sm:$0xf] %vm34, 1
    $region17: #{tpu_custom_call.1} parent=1 // pred_fallthru
      _
    // Predicated region
    $region18: #{tpu_custom_call.1} parent=1 // pred_check
      _
    $region19: #{tpu_custom_call.1} parent=1 // pred_check_branch
      %37 = sbr.rel (0) target = $region21
    $region20: #{tpu_custom_call.1} parent=1 // pred_region
      %s39 = ssub.s32 64, 64
      %40 = vsyncadd [#allocation4], %s39
      %s42 = sshll.u32 [#allocation5], 4
      %s43 = int_to_ptr.vmem [resolvable:$true] %s42
      %45 = dma.vmem_to_hbm [thread:$0]  %s43, 64, %s1, [#allocation4]
    $region21: #{tpu_custom_call.1} parent=1 // pred_fallthru
      _
    // Predicated region
    $region22: #{tpu_custom_call.1} parent=1 // pred_check
      _
    $region23: #{tpu_custom_call.1} parent=1 // pred_check_branch
      %47 = sbr.rel (0) target = $region25
    $region24: #{tpu_custom_call.1} parent=1 // pred_region
      %48 = dma.done [#allocation4], 64
    $region25: #{tpu_custom_call.1} parent=1 // pred_fallthru
      _
    %49 = vsyncpa [#allocation3], 1
    %50 = vsyncpa [#allocation4], 1

</llo_original>
